<compile_context>
chip_gen: v5e
topology: v5e:2x2
jax: 0.10.0
libtpu: 0.0.40
codegen_flags: <defaults>
</compile_context>

<pallas_src>
import jax
import jax.numpy as jnp
from jax.experimental import pallas as pl
from jax.experimental.pallas import tpu as pltpu


def _round_up(x, m):
    return ((x + m - 1) // m) * m


def actor_critic_kernel(z_ref, h_ref, w1z_ref, w1h_ref, b1_ref, w2_ref, b2_ref,
                        out_ref):
    # Fused layer 1: [TB, HF] hidden for actor||critic (concat folded into 2 matmuls).
    hid = (jnp.dot(z_ref[...], w1z_ref[...], preferred_element_type=jnp.float32)
           + jnp.dot(h_ref[...], w1h_ref[...], preferred_element_type=jnp.float32)
           + b1_ref[...])
    hid = jnp.maximum(hid, 0.0)
    # Fused layer 2: block-diagonal weight -> single lane-dense [TB, 128*k] store.
    out_ref[...] = (jnp.dot(hid, w2_ref[...], preferred_element_type=jnp.float32)
                    + b2_ref[...]).astype(out_ref.dtype)


def pack_params(params, z_dim, h_dim):
    """Pack raw (pre-transposed, [in, out]) actor/critic params into fused,
    lane-dense weights for the kernel."""
    hid_a = params["wa2"].shape[0]
    hid_c = params["wc2"].shape[0]
    act_dim = params["wa2"].shape[1]

    HF = _round_up(hid_a + hid_c, 128)      # fused hidden width (>=128, lane-aligned)
    OUT = _round_up(act_dim + 1, 128)       # fused output width  (>=128, lane-aligned)

    w1z = jnp.zeros((z_dim, HF), jnp.float32)
    w1z = w1z.at[:, :hid_a].set(params["wa1"][:z_dim, :])
    w1z = w1z.at[:, hid_a:hid_a + hid_c].set(params["wc1"])

    w1h = jnp.zeros((h_dim, HF), jnp.float32)
    w1h = w1h.at[:, :hid_a].set(params["wa1"][z_dim:, :])   # critic half stays 0

    b1 = jnp.zeros((1, HF), jnp.float32)
    b1 = b1.at[:, :hid_a].set(params["ba1"].reshape(1, -1))
    b1 = b1.at[:, hid_a:hid_a + hid_c].set(params["bc1"].reshape(1, -1))

    w2 = jnp.zeros((HF, OUT), jnp.float32)
    w2 = w2.at[:hid_a, :act_dim].set(params["wa2"])
    w2 = w2.at[hid_a:hid_a + hid_c, act_dim:act_dim + 1].set(params["wc2"])

    b2 = jnp.zeros((1, OUT), jnp.float32)
    b2 = b2.at[:, :act_dim].set(params["ba2"].reshape(1, -1))
    b2 = b2.at[:, act_dim:act_dim + 1].set(params["bc2"].reshape(1, -1))

    return {"w1z": w1z, "w1h": w1h, "b1": b1, "w2": w2, "b2": b2,
            "act_dim": act_dim}


def actor_critic_forward(z_state, h_state, packed):
    B, Z = z_state.shape
    H = h_state.shape[1]
    HF = packed["w1z"].shape[1]
    OUT = packed["w2"].shape[1]
    A = packed["act_dim"]

    # Batch tile: multiple of 8 sublanes, up to 512 rows; pad batch to the tile.
    TB = max(8, min(512, _round_up(B, 8)))
    B_pad = _round_up(B, TB)
    if B_pad != B:
        z_state = jnp.pad(z_state, ((0, B_pad - B), (0, 0)))
        h_state = jnp.pad(h_state, ((0, B_pad - B), (0, 0)))
    nb = B_pad // TB

    out = pl.pallas_call(
        actor_critic_kernel,
        out_shape=jax.ShapeDtypeStruct((B_pad, OUT), jnp.float32),
        grid_spec=pltpu.PrefetchScalarGridSpec(
            num_scalar_prefetch=0,
            grid=(nb,),
            in_specs=[
                pl.BlockSpec((TB, Z), lambda i: (i, 0)),   # z: batch-tiled
                pl.BlockSpec((TB, H), lambda i: (i, 0)),   # h: batch-tiled
                pl.BlockSpec((Z, HF), lambda i: (0, 0)),   # weights: VMEM-resident
                pl.BlockSpec((H, HF), lambda i: (0, 0)),
                pl.BlockSpec((1, HF), lambda i: (0, 0)),
                pl.BlockSpec((HF, OUT), lambda i: (0, 0)),
                pl.BlockSpec((1, OUT), lambda i: (0, 0)),
            ],
            out_specs=pl.BlockSpec((TB, OUT), lambda i: (i, 0)),
        ),
        compiler_params=pltpu.CompilerParams(
            dimension_semantics=("parallel",)),   # megacore / 2-TC sharding
    )(z_state, h_state, packed["w1z"], packed["w1h"], packed["b1"],
      packed["w2"], packed["b2"])

    action = out[:B, :A]
    value = out[:B, A:A + 1]
    return action, value


def make_params(key, z_dim, h_dim, hid, act_dim):
    """Deterministic synthetic parameters (PyTorch Linear, pre-transposed [in, out])."""
    ks = jax.random.split(key, 8)
    scale = 0.1
    return {
        "wa1": scale * jax.random.normal(ks[0], (z_dim + h_dim, hid), jnp.float32),
        "ba1": scale * jax.random.normal(ks[1], (hid,), jnp.float32),
        "wa2": scale * jax.random.normal(ks[2], (hid, act_dim), jnp.float32),
        "ba2": scale * jax.random.normal(ks[3], (act_dim,), jnp.float32),
        "wc1": scale * jax.random.normal(ks[4], (z_dim, hid), jnp.float32),
        "bc1": scale * jax.random.normal(ks[5], (hid,), jnp.float32),
        "wc2": scale * jax.random.normal(ks[6], (hid, 1), jnp.float32),
        "bc2": scale * jax.random.normal(ks[7], (1,), jnp.float32),
    }


def reference_forward(z_state, h_state, params):
    """Pure-JAX reference mirroring the PyTorch ActorCritic.forward."""
    x = jnp.concatenate((z_state, h_state), axis=-1)
    a_hid = jnp.maximum(x @ params["wa1"] + params["ba1"], 0.0)
    action = a_hid @ params["wa2"] + params["ba2"]
    c_hid = jnp.maximum(z_state @ params["wc1"] + params["bc1"], 0.0)
    value = c_hid @ params["wc2"] + params["bc2"]
    return action, value


if __name__ == "__main__":
    B, Z, H, HID, A = 2, 32, 32, 64, 8

    key = jax.random.PRNGKey(0)
    k_z, k_h, k_p = jax.random.split(key, 3)
    z_state = jax.random.normal(k_z, (B, Z), jnp.float32)
    h_state = jax.random.normal(k_h, (B, H), jnp.float32)

    params = make_params(k_p, Z, H, HID, A)
    packed = pack_params(params, Z, H)

    action_pred, value_pred = actor_critic_forward(z_state, h_state, packed)
    action_pred = jax.block_until_ready(action_pred)
    value_pred = jax.block_until_ready(value_pred)

    a_ref, v_ref = reference_forward(z_state, h_state, params)
    assert action_pred.shape == (B, A) and value_pred.shape == (B, 1)
    assert jnp.allclose(action_pred, a_ref, atol=1e-5, rtol=1e-5)
    assert jnp.allclose(value_pred, v_ref, atol=1e-5, rtol=1e-5)

    print("KERNEL_OK")
</pallas_src>

<mosaic_0001>
module attributes {stable_mosaic.version = 11 : i64} {
  func.func @actor_critic_kernel(%arg0: i32, %arg1: memref<8x32xf32, #tpu.memory_space<vmem>>, %arg2: memref<8x32xf32, #tpu.memory_space<vmem>>, %arg3: memref<32x128xf32, #tpu.memory_space<vmem>>, %arg4: memref<32x128xf32, #tpu.memory_space<vmem>>, %arg5: memref<1x128xf32, #tpu.memory_space<vmem>>, %arg6: memref<128x128xf32, #tpu.memory_space<vmem>>, %arg7: memref<1x128xf32, #tpu.memory_space<vmem>>, %arg8: memref<8x128xf32, #tpu.memory_space<vmem>>) attributes {dimension_semantics = [#tpu.dimension_semantics<parallel>], iteration_bounds = array<i64: 1>, scalar_prefetch = 0 : i64, scratch_operands = 0 : i64, tpu.core_type = #tpu.core_type<tc>, window_params = [{transform_indices = @transform_0, window_bounds = array<i64: 8, 32>}, {transform_indices = @transform_1, window_bounds = array<i64: 8, 32>}, {pipeline_mode = #tpu.pipeline_mode<synchronous>, transform_indices = @transform_2, window_bounds = array<i64: 32, 128>}, {pipeline_mode = #tpu.pipeline_mode<synchronous>, transform_indices = @transform_3, window_bounds = array<i64: 32, 128>}, {pipeline_mode = #tpu.pipeline_mode<synchronous>, transform_indices = @transform_4, window_bounds = array<i64: 1, 128>}, {pipeline_mode = #tpu.pipeline_mode<synchronous>, transform_indices = @transform_5, window_bounds = array<i64: 128, 128>}, {pipeline_mode = #tpu.pipeline_mode<synchronous>, transform_indices = @transform_6, window_bounds = array<i64: 1, 128>}, {transform_indices = @transform_7, window_bounds = array<i64: 8, 128>}]} {
    %c0 = arith.constant 0 : index
    %c0_0 = arith.constant 0 : index
    %0 = vector.load %arg1[%c0, %c0_0] : memref<8x32xf32, #tpu.memory_space<vmem>>, vector<8x32xf32>
    %c0_1 = arith.constant 0 : index
    %c0_2 = arith.constant 0 : index
    %1 = vector.load %arg3[%c0_1, %c0_2] : memref<32x128xf32, #tpu.memory_space<vmem>>, vector<32x128xf32>
    %cst = arith.constant dense<0.000000e+00> : vector<8x128xf32>
    %2 = tpu.matmul %0, %1, %cst {dimension_numbers = #tpu.dot_dimension_numbers<[1], [0], [0], [1], [0, 0, 1, 1], [], []>} : vector<8x32xf32>, vector<32x128xf32>, vector<8x128xf32> -> vector<8x128xf32>
    %c0_3 = arith.constant 0 : index
    %c0_4 = arith.constant 0 : index
    %3 = vector.load %arg2[%c0_3, %c0_4] : memref<8x32xf32, #tpu.memory_space<vmem>>, vector<8x32xf32>
    %c0_5 = arith.constant 0 : index
    %c0_6 = arith.constant 0 : index
    %4 = vector.load %arg4[%c0_5, %c0_6] : memref<32x128xf32, #tpu.memory_space<vmem>>, vector<32x128xf32>
    %cst_7 = arith.constant dense<0.000000e+00> : vector<8x128xf32>
    %5 = tpu.matmul %3, %4, %cst_7 {dimension_numbers = #tpu.dot_dimension_numbers<[1], [0], [0], [1], [0, 0, 1, 1], [], []>} : vector<8x32xf32>, vector<32x128xf32>, vector<8x128xf32> -> vector<8x128xf32>
    %6 = arith.addf %2, %5 : vector<8x128xf32>
    %c0_8 = arith.constant 0 : index
    %c0_9 = arith.constant 0 : index
    %7 = vector.load %arg5[%c0_8, %c0_9] : memref<1x128xf32, #tpu.memory_space<vmem>>, vector<1x128xf32>
    %8 = vector.broadcast %7 : vector<1x128xf32> to vector<8x128xf32>
    %9 = arith.addf %6, %8 : vector<8x128xf32>
    %cst_10 = arith.constant 0.000000e+00 : f32
    %10 = vector.broadcast %cst_10 : f32 to vector<8x128xf32>
    %11 = arith.maximumf %9, %10 : vector<8x128xf32>
    %c0_11 = arith.constant 0 : index
    %c0_12 = arith.constant 0 : index
    %12 = vector.load %arg6[%c0_11, %c0_12] : memref<128x128xf32, #tpu.memory_space<vmem>>, vector<128x128xf32>
    %cst_13 = arith.constant dense<0.000000e+00> : vector<8x128xf32>
    %13 = tpu.matmul %11, %12, %cst_13 {dimension_numbers = #tpu.dot_dimension_numbers<[1], [0], [0], [1], [0, 0, 1, 1], [], []>} : vector<8x128xf32>, vector<128x128xf32>, vector<8x128xf32> -> vector<8x128xf32>
    %c0_14 = arith.constant 0 : index
    %c0_15 = arith.constant 0 : index
    %14 = vector.load %arg7[%c0_14, %c0_15] : memref<1x128xf32, #tpu.memory_space<vmem>>, vector<1x128xf32>
    %15 = vector.broadcast %14 : vector<1x128xf32> to vector<8x128xf32>
    %16 = arith.addf %13, %15 : vector<8x128xf32>
    %c0_16 = arith.constant 0 : index
    %c0_17 = arith.constant 0 : index
    %17 = vector.load %arg8[%c0_16, %c0_17] : memref<8x128xf32, #tpu.memory_space<vmem>>, vector<8x128xf32>
    tpu.vector_store %arg8[%c0_16, %c0_17], %16 {strides = array<i32>} : memref<8x128xf32, #tpu.memory_space<vmem>>, vector<8x128xf32>,
    return
  }
  func.func @transform_0(%arg0: i32) -> (i32, i32) {
    %c0_i32 = arith.constant 0 : i32
    %c0_i32_0 = arith.constant 0 : i32
    return %arg0, %c0_i32 : i32, i32
  }
  func.func @transform_1(%arg0: i32) -> (i32, i32) {
    %c0_i32 = arith.constant 0 : i32
    %c0_i32_0 = arith.constant 0 : i32
    return %arg0, %c0_i32 : i32, i32
  }
  func.func @transform_2(%arg0: i32) -> (i32, i32) {
    %c0_i32 = arith.constant 0 : i32
    %c0_i32_0 = arith.constant 0 : i32
    %c0_i32_1 = arith.constant 0 : i32
    return %c0_i32, %c0_i32_0 : i32, i32
  }
  func.func @transform_3(%arg0: i32) -> (i32, i32) {
    %c0_i32 = arith.constant 0 : i32
    %c0_i32_0 = arith.constant 0 : i32
    %c0_i32_1 = arith.constant 0 : i32
    return %c0_i32, %c0_i32_0 : i32, i32
  }
  func.func @transform_4(%arg0: i32) -> (i32, i32) {
    %c0_i32 = arith.constant 0 : i32
    %c0_i32_0 = arith.constant 0 : i32
    %c0_i32_1 = arith.constant 0 : i32
    return %c0_i32, %c0_i32_0 : i32, i32
  }
  func.func @transform_5(%arg0: i32) -> (i32, i32) {
    %c0_i32 = arith.constant 0 : i32
    %c0_i32_0 = arith.constant 0 : i32
    %c0_i32_1 = arith.constant 0 : i32
    return %c0_i32, %c0_i32_0 : i32, i32
  }
  func.func @transform_6(%arg0: i32) -> (i32, i32) {
    %c0_i32 = arith.constant 0 : i32
    %c0_i32_0 = arith.constant 0 : i32
    %c0_i32_1 = arith.constant 0 : i32
    return %c0_i32, %c0_i32_0 : i32, i32
  }
  func.func @transform_7(%arg0: i32) -> (i32, i32) {
    %c0_i32 = arith.constant 0 : i32
    %c0_i32_0 = arith.constant 0 : i32
    return %arg0, %c0_i32 : i32, i32
  }
}

</mosaic_0001>

<llo_original>
// kernel: tpu_custom_call.1
$region0: #{tpu_custom_call.1}
  #allocation0 [shape = 'u32[]', space=smem, size = 0x4, offset = 0x4, fixed_abs, tag = 'smem constant byte address 0x4 - core index']
  #allocation1 [shape = 'u32[72,128]{1,0:T(1,128)}', space=vmem, size = 0x9000, scoped, tag = 'internal scratch']
  %s0 = inlined_call_operand.hbm [shape: f32[8,32], index: 0, kind: input, shape index: {}]
  %s1 = inlined_call_operand.hbm [shape: f32[8,32], index: 1, kind: input, shape index: {}]
  %s2 = inlined_call_operand.hbm [shape: f32[32,128], index: 2, kind: input, shape index: {}]
  %s3 = inlined_call_operand.hbm [shape: f32[32,128], index: 3, kind: input, shape index: {}]
  %s4 = inlined_call_operand.vmem [shape: f32[1,128], index: 4, kind: input, shape index: {}]
  %s5 = inlined_call_operand.hbm [shape: f32[128,128], index: 5, kind: input, shape index: {}]
  %s6 = inlined_call_operand.vmem [shape: f32[1,128], index: 6, kind: input, shape index: {}]
  %s7 = inlined_call_operand.hbm [shape: f32[8,128], index: 7, kind: output, shape index: {}]
  %s8 = sld [smem:[#allocation0]]
  $region58: #{tpu_custom_call.1} parent=0
    _
  %s10 = ssub.s32 1, %s8
  %s11 = scalar_select 0, %s10, %s8
  $region1: #{tpu_custom_call.1} parent=0
    #allocation2 [shape = 'u8[4096]{0}', space=vmem, size = 0x1000, scoped, tag = 'input window, operand 0, single buffered']
    #allocation3 [shape = 's32[1]{0}', space=sflag, size = 0x4, scoped, tag = 'scoped memory for tpu_custom_call.1']
    #allocation4 [shape = 's32[1]{0}', space=sflag, size = 0x4, scoped, tag = 'scoped memory for tpu_custom_call.1']
    #allocation5 [shape = 'u8[4096]{0}', space=vmem, size = 0x1000, scoped, tag = 'input window, operand 1, single buffered']
    #allocation6 [shape = 's32[1]{0}', space=sflag, size = 0x4, scoped, tag = 'scoped memory for tpu_custom_call.1']
    #allocation7 [shape = 'u8[16384]{0}', space=vmem, size = 0x4000, scoped, tag = 'input window, operand 2, single buffered']
    #allocation8 [shape = 'u8[16384]{0}', space=vmem, size = 0x4000, scoped, tag = 'input window, operand 3, single buffered']
    #allocation9 [shape = 's32[1]{0}', space=sflag, size = 0x4, scoped, tag = 'scoped memory for tpu_custom_call.1']
    #allocation10 [shape = 'u8[65536]{0}', space=vmem, size = 0x10000, scoped, tag = 'input window, operand 5, single buffered']
    #allocation11 [shape = 'u8[4096]{0}', space=vmem, size = 0x1000, scoped, tag = 'output window, operand 0, single buffered']
    %12 = vsyncpa [#allocation3], 0
    %13 = vsyncpa [#allocation6], 0
    %14 = vsyncpa [#allocation9], 0
    %15 = vsyncpa [#allocation4], 0
    // Predicated region
    $region2: #{tpu_custom_call.1} parent=1 // pred_check
      _
    $region3: #{tpu_custom_call.1} parent=1 // pred_check_branch
      %17 = sbr.rel (0) target = $region5
    $region4: #{tpu_custom_call.1} parent=1 // pred_region
      %19 = vsyncadd [#allocation3], 0
      %s21 = sshll.u32 %s0, 4
      %s22 = int_to_ptr.hbm [resolvable:$true] %s21
      %s23 = sshll.u32 [#allocation2], 4
      %s24 = int_to_ptr.vmem [resolvable:$true] %s23
      %26 = dma.hbm_to_vmem [thread:$0]  %s22, 128, %s24, [#allocation3]
    $region5: #{tpu_custom_call.1} parent=1 // pred_fallthru
      _
    // Predicated region
    $region6: #{tpu_custom_call.1} parent=1 // pred_check
      _
    $region7: #{tpu_custom_call.1} parent=1 // pred_check_branch
      %28 = sbr.rel (0) target = $region9
    $region8: #{tpu_custom_call.1} parent=1 // pred_region
      %30 = vsyncadd [#allocation6], 0
      %s32 = sshll.u32 %s1, 4
      %s33 = int_to_ptr.hbm [resolvable:$true] %s32
      %s34 = sshll.u32 [#allocation5], 4
      %s35 = int_to_ptr.vmem [resolvable:$true] %s34
      %37 = dma.hbm_to_vmem [thread:$0]  %s33, 128, %s35, [#allocation6]
    $region9: #{tpu_custom_call.1} parent=1 // pred_fallthru
      _
    // Predicated region
    $region10: #{tpu_custom_call.1} parent=1 // pred_check
      _
    $region11: #{tpu_custom_call.1} parent=1 // pred_check_branch
      %39 = sbr.rel (0) target = $region13
    $region12: #{tpu_custom_call.1} parent=1 // pred_region
      %41 = vsyncadd [#allocation6], 0
      %s42 = sshll.u32 %s2, 4
      %s43 = int_to_ptr.hbm [resolvable:$true] %s42
      %s44 = sshll.u32 [#allocation7], 4
      %s45 = int_to_ptr.vmem [resolvable:$true] %s44
      %50 = dma.hbm_to_vmem [thread:$0]  %s43, 512, %s45, [#allocation6], 128, 128, 8
    $region13: #{tpu_custom_call.1} parent=1 // pred_fallthru
      _
    // Predicated region
    $region14: #{tpu_custom_call.1} parent=1 // pred_check
      _
    $region15: #{tpu_custom_call.1} parent=1 // pred_check_branch
      %52 = sbr.rel (0) target = $region17
    $region16: #{tpu_custom_call.1} parent=1 // pred_region
      %54 = vsyncadd [#allocation9], 0
      %s55 = sshll.u32 %s3, 4
      %s56 = int_to_ptr.hbm [resolvable:$true] %s55
      %s57 = sshll.u32 [#allocation8], 4
      %s58 = int_to_ptr.vmem [resolvable:$true] %s57
      %63 = dma.hbm_to_vmem [thread:$0]  %s56, 512, %s58, [#allocation9], 128, 128, 8
    $region17: #{tpu_custom_call.1} parent=1 // pred_fallthru
      _
    // Predicated region
    $region18: #{tpu_custom_call.1} parent=1 // pred_check
      _
    $region19: #{tpu_custom_call.1} parent=1 // pred_check_branch
      %65 = sbr.rel (0) target = $region21
    $region20: #{tpu_custom_call.1} parent=1 // pred_region
      _
    $region21: #{tpu_custom_call.1} parent=1 // pred_fallthru
      _
    // Predicated region
    $region22: #{tpu_custom_call.1} parent=1 // pred_check
      _
    $region23: #{tpu_custom_call.1} parent=1 // pred_check_branch
      %67 = sbr.rel (0) target = $region25
    $region24: #{tpu_custom_call.1} parent=1 // pred_region
      %69 = vsyncadd [#allocation9], 0
      %s70 = sshll.u32 %s5, 4
      %s71 = int_to_ptr.hbm [resolvable:$true] %s70
      %s72 = sshll.u32 [#allocation10], 4
      %s73 = int_to_ptr.vmem [resolvable:$true] %s72
      %78 = dma.hbm_to_vmem [thread:$0]  %s71, 2048, %s73, [#allocation9], 128, 128, 8
    $region25: #{tpu_custom_call.1} parent=1 // pred_fallthru
      _
    // Predicated region
    $region26: #{tpu_custom_call.1} parent=1 // pred_check
      _
    $region27: #{tpu_custom_call.1} parent=1 // pred_check_branch
      %80 = sbr.rel (0) target = $region29
    $region28: #{tpu_custom_call.1} parent=1 // pred_region
      _
    $region29: #{tpu_custom_call.1} parent=1 // pred_fallthru
      _
    // Predicated region
    $region30: #{tpu_custom_call.1} parent=1 // pred_check
      _
    $region31: #{tpu_custom_call.1} parent=1 // pred_check_branch
      %82 = sbr.rel (0) target = $region33
    $region32: #{tpu_custom_call.1} parent=1 // pred_region
      %84 = dma.done [#allocation3], 128
    $region33: #{tpu_custom_call.1} parent=1 // pred_fallthru
      _
    // Predicated region
    $region34: #{tpu_custom_call.1} parent=1 // pred_check
      _
    $region35: #{tpu_custom_call.1} parent=1 // pred_check_branch
      %86 = sbr.rel (0) target = $region37
    $region36: #{tpu_custom_call.1} parent=1 // pred_region
      %88 = dma.done [#allocation6], 128
    $region37: #{tpu_custom_call.1} parent=1 // pred_fallthru
      _
    // Predicated region
    $region38: #{tpu_custom_call.1} parent=1 // pred_check
      _
    $region39: #{tpu_custom_call.1} parent=1 // pred_check_branch
      %90 = sbr.rel (0) target = $region41
    $region40: #{tpu_custom_call.1} parent=1 // pred_region
      %92 = dma.done [#allocation6], 512
    $region41: #{tpu_custom_call.1} parent=1 // pred_fallthru
      _
    // Predicated region
    $region42: #{tpu_custom_call.1} parent=1 // pred_check
      _
    $region43: #{tpu_custom_call.1} parent=1 // pred_check_branch
      %94 = sbr.rel (0) target = $region45
    $region44: #{tpu_custom_call.1} parent=1 // pred_region
      %96 = dma.done [#allocation9], 512
    $region45: #{tpu_custom_call.1} parent=1 // pred_fallthru
      _
    // Predicated region
    $region46: #{tpu_custom_call.1} parent=1 // pred_check
      _
    $region47: #{tpu_custom_call.1} parent=1 // pred_check_branch
      %98 = sbr.rel (0) target = $region49
    $region48: #{tpu_custom_call.1} parent=1 // pred_region
      %100 = dma.done [#allocation9], 2048
    $region49: #{tpu_custom_call.1} parent=1 // pred_fallthru
      _
    %v101 = vld [vmem:[#allocation2] sm:$0xff]
    %v102 = vld [vmem:[#allocation7] sm:$0xff]
    %v103 = vld [vmem:[#allocation7 + $0x8] sm:$0xff]
    %v104 = vld [vmem:[#allocation7 + $0x10] sm:$0xff]
    %v105 = vld [vmem:[#allocation7 + $0x18] sm:$0xff]
    %v106 = vld [vmem:[#allocation5] sm:$0xff]
    %v107 = vld [vmem:[#allocation8] sm:$0xff]
    %v108 = vld [vmem:[#allocation8 + $0x8] sm:$0xff]
    %v109 = vld [vmem:[#allocation8 + $0x10] sm:$0xff]
    %v110 = vld [vmem:[#allocation8 + $0x18] sm:$0xff]
    %vm111 = vcmask 261120
    %v113 = vsel %vm111, %v106, 0
    %115 = vmatpush.msra.mxu0 0.0
    %116 = vmatpush.msra.mxu0 0.0
    %117 = vmatpush.msra.mxu0 0.0
    %118 = vmatpush.msra.mxu0 0.0
    %119 = vmatpush.msra.mxu0 0.0
    %120 = vmatpush.msra.mxu0 0.0
    %121 = vmatpush.msra.mxu0 0.0
    %122 = vmatpush.msra.mxu0 0.0
    %123 = vmatpush.msra.mxu0 0.0
    %124 = vmatpush.msra.mxu0 0.0
    %125 = vmatpush.msra.mxu0 0.0
    %126 = vmatpush.msra.mxu0 0.0
    %127 = vmatpush.msra.mxu0 %v110
    %128 = vmatpush.msra.mxu0 %v109
    %129 = vmatpush.msra.mxu0 %v108
    %130 = vmatpush.msra.mxu0 %v107
    %131 = vmatmul.f32.gmra.mxu0 %v113
    %v132 = vpop.f32.mrf.mxu0
    %v133 = vadd.f32 0.0, %v132
    %134 = vdwg.mxu0
    %v136 = vsel %vm111, %v101, 0
    %138 = vmatpush.msra.mxu0 0.0
    %139 = vmatpush.msra.mxu0 0.0
    %140 = vmatpush.msra.mxu0 0.0
    %141 = vmatpush.msra.mxu0 0.0
    %142 = vmatpush.msra.mxu0 0.0
    %143 = vmatpush.msra.mxu0 0.0
    %144 = vmatpush.msra.mxu0 0.0
    %145 = vmatpush.msra.mxu0 0.0
    %146 = vmatpush.msra.mxu0 0.0
    %147 = vmatpush.msra.mxu0 0.0
    %148 = vmatpush.msra.mxu0 0.0
    %149 = vmatpush.msra.mxu0 0.0
    %150 = vmatpush.msra.mxu0 %v105
    %151 = vmatpush.msra.mxu0 %v104
    %152 = vmatpush.msra.mxu0 %v103
    %153 = vmatpush.msra.mxu0 %v102
    %154 = vmatmul.f32.gmra.mxu0 %v136
    %v155 = vpop.f32.mrf.mxu0
    %v156 = vadd.f32 %v133, %v155
    %157 = vdwg.mxu0
    %v158 = vld [vmem:[%s4] sm:$0x1]
    %v160 = vperm.slane %v158, 0
    %v162 = vadd.f32 %v156, %v160
    %v163 = vmax.f32 %v162, 0.0
    %v164 = vld [vmem:[#allocation10] sm:$0xff]
    %v165 = vld [vmem:[#allocation10 + $0x8] sm:$0xff]
    %v166 = vld [vmem:[#allocation10 + $0x10] sm:$0xff]
    %v167 = vld [vmem:[#allocation10 + $0x18] sm:$0xff]
    %v168 = vld [vmem:[#allocation10 + $0x20] sm:$0xff]
    %v169 = vld [vmem:[#allocation10 + $0x28] sm:$0xff]
    %v170 = vld [vmem:[#allocation10 + $0x30] sm:$0xff]
    %v171 = vld [vmem:[#allocation10 + $0x38] sm:$0xff]
    %v172 = vld [vmem:[#allocation10 + $0x40] sm:$0xff]
    %v173 = vld [vmem:[#allocation10 + $0x48] sm:$0xff]
    %v174 = vld [vmem:[#allocation10 + $0x50] sm:$0xff]
    %v175 = vld [vmem:[#allocation10 + $0x58] sm:$0xff]
    %v176 = vld [vmem:[#allocation10 + $0x60] sm:$0xff]
    %v177 = vld [vmem:[#allocation10 + $0x68] sm:$0xff]
    %v178 = vld [vmem:[#allocation10 + $0x70] sm:$0xff]
    %v179 = vld [vmem:[#allocation10 + $0x78] sm:$0xff]
    %v180 = vld [vmem:[%s6] sm:$0x1]
    %v182 = vperm.slane %v180, 0
    %184 = vmatpush.msra.mxu0 %v179
    %185 = vmatpush.msra.mxu0 %v178
    %186 = vmatpush.msra.mxu0 %v177
    %187 = vmatpush.msra.mxu0 %v176
    %188 = vmatpush.msra.mxu0 %v175
    %189 = vmatpush.msra.mxu0 %v174
    %190 = vmatpush.msra.mxu0 %v173
    %191 = vmatpush.msra.mxu0 %v172
    %192 = vmatpush.msra.mxu0 %v171
    %193 = vmatpush.msra.mxu0 %v170
    %194 = vmatpush.msra.mxu0 %v169
    %195 = vmatpush.msra.mxu0 %v168
    %196 = vmatpush.msra.mxu0 %v167
    %197 = vmatpush.msra.mxu0 %v166
    %198 = vmatpush.msra.mxu0 %v165
    %199 = vmatpush.msra.mxu0 %v164
    %200 = vmatmul.f32.gmra.mxu0 %v163
    %v201 = vpop.f32.mrf.mxu0
    %v202 = vadd.f32 %v182, %v201
    %203 = vdwg.mxu0
    %204 = vst [vmem:[#allocation11] sm:$0xff] %v202
    // Predicated region
    $region50: #{tpu_custom_call.1} parent=1 // pred_check
      _
    $region51: #{tpu_custom_call.1} parent=1 // pred_check_branch
      %206 = sbr.rel (0) target = $region53
    $region52: #{tpu_custom_call.1} parent=1 // pred_region
      %208 = vsyncadd [#allocation4], 0
      %s210 = sshll.u32 [#allocation11], 4
      %s211 = int_to_ptr.vmem [resolvable:$true] %s210
      %s212 = sshll.u32 %s7, 4
      %s213 = int_to_ptr.hbm [resolvable:$true] %s212
      %215 = dma.vmem_to_hbm [thread:$0]  %s211, 128, %s213, [#allocation4]
    $region53: #{tpu_custom_call.1} parent=1 // pred_fallthru
      _
    // Predicated region
    $region54: #{tpu_custom_call.1} parent=1 // pred_check
      _
    $region55: #{tpu_custom_call.1} parent=1 // pred_check_branch
      %217 = sbr.rel (0) target = $region57
    $region56: #{tpu_custom_call.1} parent=1 // pred_region
      %219 = dma.done [#allocation4], 128
    $region57: #{tpu_custom_call.1} parent=1 // pred_fallthru
      _
    %220 = vsyncpa [#allocation3], 1
    %221 = vsyncpa [#allocation6], 1
    %222 = vsyncpa [#allocation9], 1
    %223 = vsyncpa [#allocation4], 1

</llo_original>
